<compile_context>
chip_gen: v5e
topology: v5e:2x2
jax: 0.10.0
libtpu: 0.0.40
codegen_flags: <defaults>
</compile_context>

<pallas_src>
import functools
import math

import jax
import jax.numpy as jnp
from jax.experimental import pallas as pl
from jax.experimental.pallas import tpu as pltpu


def _round_up(x, m):
    return ((x + m - 1) // m) * m


# ----------------------------------------------------------------------------
# Fused SupCon + CE kernel
# ----------------------------------------------------------------------------
def _supcon_ce_kernel(anchor_ref, contrast_ref, row_lbl_ref, col_lbl_ref,
                      preds_ref, ce_lbl_ref,
                      contrast_out_ref, ce_out_ref,
                      m_sc, l_sc, psum_sc, pcnt_sc,
                      *, n_anchor, n_contrast, loss_scale):
    """One (anchor-row-tile, contrast-col-tile) step of the SupCon loss.

    anchor_ref   : [TM, Dp] bf16  feature tile, already scaled by sqrt(1/T)
    contrast_ref : [TK, Dp] bf16  feature tile, already scaled by sqrt(1/T)
    row_lbl_ref  : [TM, 1]  int32 mask labels of the anchor rows
    col_lbl_ref  : [1, TK]  int32 mask labels of the contrast columns
    preds_ref    : [B, C]   f32   CE logits (resident, constant index map)
    ce_lbl_ref   : [B, 1]   int32 CE class ids
    contrast_out_ref : [1,1,128] f32  per-row-tile partial SupCon loss sum
    ce_out_ref       : [1,1,128] f32  CE loss (block 0 only; zeros elsewhere)
    scratch (all [TM,1] f32): running row max, running sum-exp,
                              sum of positive logits, positive count
    """
    i = pl.program_id(0)
    k = pl.program_id(1)
    nk = pl.num_programs(1)
    tm = anchor_ref.shape[0]
    tk = contrast_ref.shape[0]

    # ---- init per anchor-row tile (first step along the reduction axis) ----
    @pl.when(k == 0)
    def _init():
        m_sc[...] = jnp.full(m_sc.shape, -jnp.inf, jnp.float32)
        l_sc[...] = jnp.zeros(l_sc.shape, jnp.float32)
        psum_sc[...] = jnp.zeros(psum_sc.shape, jnp.float32)
        pcnt_sc[...] = jnp.zeros(pcnt_sc.shape, jnp.float32)
        ce_out_ref[...] = jnp.zeros(ce_out_ref.shape, jnp.float32)

    # ---- fused (tiny) cross-entropy: computed exactly once, at (0, 0) ----
    @pl.when(jnp.logical_and(i == 0, k == 0))
    def _ce():
        p = preds_ref[...]                                   # [B, C] f32
        lbl = ce_lbl_ref[...]                                # [B, 1] int32
        bsz, ncls = p.shape
        mx = jnp.max(p, axis=1, keepdims=True)
        lse = jnp.log(jnp.sum(jnp.exp(p - mx), axis=1, keepdims=True)) + mx
        onehot = jax.lax.broadcasted_iota(jnp.int32, (bsz, ncls), 1) == lbl
        picked = jnp.sum(jnp.where(onehot, p, 0.0), axis=1, keepdims=True)
        ce = jnp.mean(lse - picked)
        ce_out_ref[...] = jnp.zeros(ce_out_ref.shape, jnp.float32) + ce

    # ---- logits tile: (a*sqrt(1/T)) . (c*sqrt(1/T))^T == (a.c^T)/T ----------
    # 'nt' dot_general: contract the lane-resident D axis directly (no .T),
    # bf16 operands on the MXU with f32 accumulation.
    logits = jax.lax.dot_general(
        anchor_ref[...], contrast_ref[...],
        dimension_numbers=(((1,), (1,)), ((), ())),
        preferred_element_type=jnp.float32)                  # [TM, TK] f32

    # ---- masks rebuilt in-kernel (no N x N mask DMA) ------------------------
    row_g = jax.lax.broadcasted_iota(jnp.int32, (tm, tk), 0) + i * tm
    col_g = jax.lax.broadcasted_iota(jnp.int32, (tm, tk), 1) + k * tk
    valid = jnp.logical_and(row_g != col_g, col_g < n_contrast)  # no self / pad
    pos = jnp.logical_and(row_lbl_ref[...] == col_lbl_ref[...], valid)

    # Self / padded entries: push to a huge negative so exp underflows to 0
    # (replaces the two separate N^2 mask multiplies of the reference code).
    masked = jnp.where(valid, logits, jnp.float32(-1e30))

    # ---- online log-sum-exp over the contrast axis --------------------------
    m_prev = m_sc[...]
    m_new = jnp.maximum(m_prev, jnp.max(masked, axis=1, keepdims=True))
    p_exp = jnp.exp(masked - m_new)
    l_sc[...] = l_sc[...] * jnp.exp(m_prev - m_new) + \
        jnp.sum(p_exp, axis=1, keepdims=True)
    m_sc[...] = m_new

    # ---- positives: accumulate raw-logit sum and count ----------------------
    # (the stability shift cancels exactly in log_prob, so raw logits suffice)
    psum_sc[...] += jnp.sum(jnp.where(pos, logits, 0.0), axis=1, keepdims=True)
    pcnt_sc[...] += jnp.sum(pos.astype(jnp.float32), axis=1, keepdims=True)

    # ---- finalize on the last reduction step --------------------------------
    @pl.when(k == nk - 1)
    def _finalize():
        lse = m_sc[...] + jnp.log(l_sc[...])                 # log sum_{j!=i} exp
        # NOTE: divides by the positive count exactly like the torch code;
        # an anchor with zero positives yields NaN there too (not changed).
        mean_log_prob_pos = psum_sc[...] / pcnt_sc[...] - lse
        loss_rows = loss_scale * mean_log_prob_pos           # [TM, 1]
        row_idx = jax.lax.broadcasted_iota(jnp.int32, (tm, 1), 0) + i * tm
        loss_rows = jnp.where(row_idx < n_anchor, loss_rows, 0.0)
        contrast_out_ref[...] = (jnp.zeros(contrast_out_ref.shape, jnp.float32)
                                 + jnp.sum(loss_rows))


# ----------------------------------------------------------------------------
# Wrapper around pallas_call
# ----------------------------------------------------------------------------
def supcon_ce_forward(contrast_feature, col_ids, preds, ce_labels, *,
                      n_anchor, temperature, base_temperature,
                      block_m=None, block_k=None):
    """Returns (contrast_loss, ce_loss) as scalars.

    block_m / block_k optionally override the anchor / contrast tile sizes
    (block_m multiple of 8, block_k multiple of 128) — useful for testing the
    multi-tile path at small N and for per-chip tuning.
    """
    nc, d = contrast_feature.shape
    na = int(n_anchor)

    # Tile choice: anchor (parallel) tile TM <= 256, contrast (reduction) tile
    # TK <= 512 -> f32 [TM,TK] working set ~0.5 MiB, far below the scoped-VMEM
    # default on v5e/v6e and v7x's 64 MiB physical VMEM.
    tm = block_m if block_m is not None else \
        min(256, max(8, pl.next_power_of_2(na)))
    tk = block_k if block_k is not None else \
        min(512, max(128, pl.next_power_of_2(nc)))
    assert tm % 8 == 0 and tk % 128 == 0, (tm, tk)

    lcm = tm * tk // math.gcd(tm, tk)
    npad = _round_up(nc, lcm)                # multiple of both tm and tk
    dpad = _round_up(d, 128)                 # lane-align D (helps v5e MXU too)
    ni = _round_up(na, tm) // tm
    nk = npad // tk

    # Fold 1/temperature into the features once (sqrt on each side of the dot
    # product) so a single bf16 array feeds both matmul operands.
    scale = float(1.0 / temperature) ** 0.5
    feat = contrast_feature.astype(jnp.float32) * scale
    feat = jnp.pad(feat, ((0, npad - nc), (0, dpad - d))).astype(jnp.bfloat16)

    ids = col_ids.astype(jnp.int32)
    row_lbl = jnp.pad(ids, (0, npad - nc), constant_values=-2).reshape(npad, 1)
    col_lbl = jnp.pad(ids, (0, npad - nc), constant_values=-1).reshape(1, npad)

    preds_f = preds.astype(jnp.float32)
    b, c = preds_f.shape
    ce_lbl = ce_labels.reshape(b, 1).astype(jnp.int32)

    kernel = functools.partial(
        _supcon_ce_kernel,
        n_anchor=na, n_contrast=nc,
        loss_scale=-(temperature / base_temperature))

    contrast_parts, ce_parts = pl.pallas_call(
        kernel,
        out_shape=(jax.ShapeDtypeStruct((ni, 1, 128), jnp.float32),
                   jax.ShapeDtypeStruct((ni, 1, 128), jnp.float32)),
        grid=(ni, nk),
        in_specs=[
            pl.BlockSpec((tm, dpad), lambda i, k: (i, 0)),   # anchor tile (resident over k)
            pl.BlockSpec((tk, dpad), lambda i, k: (k, 0)),   # contrast tile (streamed)
            pl.BlockSpec((tm, 1),    lambda i, k: (i, 0)),   # anchor-row labels
            pl.BlockSpec((1, tk),    lambda i, k: (0, k)),   # contrast-col labels
            pl.BlockSpec((b, c),     lambda i, k: (0, 0)),   # CE logits (resident)
            pl.BlockSpec((b, 1),     lambda i, k: (0, 0)),   # CE labels
        ],
        out_specs=(
            pl.BlockSpec((1, 1, 128), lambda i, k: (i, 0, 0)),
            pl.BlockSpec((1, 1, 128), lambda i, k: (i, 0, 0)),
        ),
        scratch_shapes=[
            pltpu.VMEM((tm, 1), jnp.float32),   # running row max
            pltpu.VMEM((tm, 1), jnp.float32),   # running sum of exp
            pltpu.VMEM((tm, 1), jnp.float32),   # sum of positive logits
            pltpu.VMEM((tm, 1), jnp.float32),   # positive count
        ],
        compiler_params=pltpu.CompilerParams(
            dimension_semantics=("parallel", "arbitrary")),
    )(feat, feat, row_lbl, col_lbl, preds_f, ce_lbl)

    contrast_loss = jnp.sum(contrast_parts[:, 0, 0]) / na
    ce_loss = ce_parts[0, 0, 0]
    return contrast_loss, ce_loss


# ----------------------------------------------------------------------------
# Module wrapper (mirrors the PyTorch SupConLoss forward)
# ----------------------------------------------------------------------------
def _arg(args, name):
    if isinstance(args, dict):
        return args[name]
    return getattr(args, name)


class SupConLossPallas:
    """JAX/Pallas port of SupConLoss (supports contrast_mode 'all' and 'one')."""

    def __init__(self, args, contrast_mode='all', base_temperature=0.07):
        self.use_ce = _arg(args, 'use_ce')
        self.use_contrast = _arg(args, 'use_contrast')
        self.temperature = _arg(args, 'temp')
        self.contrast_mode = contrast_mode
        self.base_temperature = base_temperature
        self.sigma_cts = _arg(args, 'sigma_cts')
        self.sigma_ce = _arg(args, 'sigma_ce')

    def __call__(self, features, preds, labels, loss_type='', *,
                 block_m=None, block_k=None):
        batch_size, n_views = features.shape[0], features.shape[1]
        feats = features.reshape(batch_size, n_views, -1)
        labels_flat = labels.reshape(-1).astype(jnp.int32)

        if loss_type == 'SimCLR':
            # eye(B) mask == "same sample id" equality
            mask_ids = jnp.arange(batch_size, dtype=jnp.int32)
        elif loss_type == 'SupCon':
            if labels_flat.shape[0] != batch_size:
                raise ValueError('Num of labels does not match num of features')
            mask_ids = labels_flat
        else:
            raise ValueError("loss_type must be 'SimCLR' or 'SupCon'")

        # torch.cat(torch.unbind(features, dim=1), dim=0) -> view-major [V*B, D]
        contrast_feature = jnp.swapaxes(feats, 0, 1).reshape(
            n_views * batch_size, -1)
        anchor_count = 1 if self.contrast_mode == 'one' else n_views
        col_ids = jnp.tile(mask_ids, n_views)      # view-major column labels

        contrast_loss, ce_loss = supcon_ce_forward(
            contrast_feature, col_ids, preds, labels_flat,
            n_anchor=anchor_count * batch_size,
            temperature=self.temperature,
            base_temperature=self.base_temperature,
            block_m=block_m, block_k=block_k)

        if self.use_ce and self.use_contrast:
            # NOTE: reproduces the original code exactly — sigma_cts is added
            # as a constant and contrast_loss does NOT enter the combined loss.
            loss = self.sigma_cts + self.sigma_ce * ce_loss
            return loss, ce_loss, contrast_loss
        elif self.use_contrast and not self.use_ce:
            return contrast_loss, contrast_loss, contrast_loss
        elif not self.use_contrast and self.use_ce:
            return ce_loss, ce_loss, ce_loss
        return None


# ----------------------------------------------------------------------------
# Pure-JAX reference (same bf16/sqrt(1/T) quantization as the kernel inputs)
# ----------------------------------------------------------------------------
def _reference_losses(features, preds, labels, *, loss_type, contrast_mode,
                      temperature, base_temperature):
    b, v, d = features.shape
    cf = jnp.swapaxes(features, 0, 1).reshape(v * b, d)
    scale = float(1.0 / temperature) ** 0.5
    cfq = (cf.astype(jnp.float32) * scale).astype(jnp.bfloat16).astype(jnp.float32)

    if contrast_mode == 'one':
        anchor = cfq[:b]
        anchor_count = 1
    else:
        anchor = cfq
        anchor_count = v
    na = anchor_count * b
    n = v * b

    logits = jnp.matmul(anchor, cfq.T,
                        precision=jax.lax.Precision.HIGHEST)   # already / T
    logits = logits - jnp.max(logits, axis=1, keepdims=True)

    if loss_type == 'SimCLR':
        base = jnp.eye(b, dtype=jnp.float32)
    else:
        lbl = labels.reshape(-1, 1)
        base = (lbl == lbl.T).astype(jnp.float32)
    mask = jnp.tile(base, (anchor_count, v))
    logits_mask = (1.0 - jnp.eye(n, dtype=jnp.float32))[:na]
    mask = mask * logits_mask

    exp_logits = jnp.exp(logits) * logits_mask
    log_prob = logits - jnp.log(exp_logits.sum(1, keepdims=True))
    mlpp = (mask * log_prob).sum(1) / mask.sum(1)
    contrast = jnp.mean(-(temperature / base_temperature) * mlpp)

    p = preds.astype(jnp.float32)
    lse = jax.nn.logsumexp(p, axis=1)
    ce = jnp.mean(lse - p[jnp.arange(b), labels.reshape(-1)])
    return contrast, ce


# ----------------------------------------------------------------------------
# Self-test
# ----------------------------------------------------------------------------
if __name__ == "__main__":
    def run_case(key, batch, n_views, feat_dim, num_classes, loss_type,
                 contrast_mode, tol, block_m=None, block_k=None):
        k1, k2, k3 = jax.random.split(key, 3)
        feats = jax.random.normal(k1, (batch, n_views, feat_dim), jnp.float32)
        feats = feats / jnp.linalg.norm(feats, axis=-1, keepdims=True)
        preds = jax.random.normal(k2, (batch, num_classes), jnp.float32)
        labels = jax.random.randint(k3, (batch,), 0, num_classes, jnp.int32)

        args = dict(use_ce=True, use_contrast=True, temp=0.07,
                    sigma_cts=1.0, sigma_ce=1.0)
        mod = SupConLossPallas(args, contrast_mode=contrast_mode)
        loss, ce, con = mod(feats, preds, labels, loss_type=loss_type,
                            block_m=block_m, block_k=block_k)
        jax.block_until_ready((loss, ce, con))

        ref_con, ref_ce = _reference_losses(
            feats, preds, labels, loss_type=loss_type,
            contrast_mode=contrast_mode, temperature=0.07,
            base_temperature=0.07)

        assert bool(jnp.isfinite(con)) and bool(jnp.isfinite(ce))
        assert jnp.allclose(con, ref_con, rtol=tol, atol=tol), (con, ref_con)
        assert jnp.allclose(ce, ref_ce, rtol=1e-4, atol=1e-4), (ce, ref_ce)
        assert jnp.allclose(loss, 1.0 + 1.0 * ref_ce, rtol=1e-4, atol=1e-4)

    keys = jax.random.split(jax.random.PRNGKey(0), 4)

    # Small single-tile cases (D padded 64 -> 128, N padded to the col tile).
    run_case(keys[0], 16, 2, 64, 10, 'SupCon', 'all', 2e-3)
    run_case(keys[1], 16, 2, 64, 10, 'SimCLR', 'all', 2e-3)
    run_case(keys[2], 16, 2, 64, 10, 'SupCon', 'one', 2e-3)

    # Multi-tile case with forced small tiles: grid (3, 2) -> exercises the
    # online-softmax accumulation, row/column padding and the parallel
    # anchor axis without needing a large batch.
    run_case(keys[3], 96, 2, 96, 10, 'SupCon', 'all', 2e-3,
             block_m=64, block_k=128)

    print("KERNEL_OK")
</pallas_src>

<mosaic_0001>
module attributes {stable_mosaic.version = 11 : i64} {
  func.func @_supcon_ce_kernel(%arg0: i32, %arg1: i32, %arg2: memref<32x128xbf16, #tpu.memory_space<vmem>>, %arg3: memref<128x128xbf16, #tpu.memory_space<vmem>>, %arg4: memref<32x1xi32, #tpu.memory_space<vmem>>, %arg5: memref<1x128xi32, #tpu.memory_space<vmem>>, %arg6: memref<16x10xf32, #tpu.memory_space<vmem>>, %arg7: memref<16x1xi32, #tpu.memory_space<vmem>>, %arg8: memref<1x1x128xf32, #tpu.memory_space<vmem>>, %arg9: memref<1x1x128xf32, #tpu.memory_space<vmem>>, %arg10: memref<32x1xf32, #tpu.memory_space<vmem>>, %arg11: memref<32x1xf32, #tpu.memory_space<vmem>>, %arg12: memref<32x1xf32, #tpu.memory_space<vmem>>, %arg13: memref<32x1xf32, #tpu.memory_space<vmem>>) attributes {dimension_semantics = [#tpu.dimension_semantics<parallel>, #tpu.dimension_semantics<arbitrary>], iteration_bounds = array<i64: 1, 1>, scalar_prefetch = 0 : i64, scratch_operands = 4 : i64, tpu.core_type = #tpu.core_type<tc>, window_params = [{transform_indices = @transform_0, window_bounds = array<i64: 32, 128>}, {transform_indices = @transform_1, window_bounds = array<i64: 128, 128>}, {transform_indices = @transform_2, window_bounds = array<i64: 32, 1>}, {transform_indices = @transform_3, window_bounds = array<i64: 1, 128>}, {pipeline_mode = #tpu.pipeline_mode<synchronous>, transform_indices = @transform_4, window_bounds = array<i64: 16, 10>}, {pipeline_mode = #tpu.pipeline_mode<synchronous>, transform_indices = @transform_5, window_bounds = array<i64: 16, 1>}, {transform_indices = @transform_6, window_bounds = array<i64: 1, 1, 128>}, {transform_indices = @transform_7, window_bounds = array<i64: 1, 1, 128>}]} {
    %c0_i32 = arith.constant 0 : i32
    %0 = arith.cmpi eq, %arg1, %c0_i32 : i32
    %1 = arith.extui %0 : i1 to i32
    %c0_i32_0 = arith.constant 0 : i32
    %2 = arith.cmpi ne, %1, %c0_i32_0 : i32
    scf.if %2 {
      %cst_36 = arith.constant 0xFF800000 : f32
      %64 = vector.broadcast %cst_36 : f32 to vector<32x1xf32>
      %c0_37 = arith.constant 0 : index
      %c0_38 = arith.constant 0 : index
      %65 = vector.load %arg10[%c0_37, %c0_38] : memref<32x1xf32, #tpu.memory_space<vmem>>, vector<32x1xf32>
      tpu.vector_store %arg10[%c0_37, %c0_38], %64 {strides = array<i32>} : memref<32x1xf32, #tpu.memory_space<vmem>>, vector<32x1xf32>,
      %cst_39 = arith.constant 0.000000e+00 : f32
      %66 = vector.broadcast %cst_39 : f32 to vector<32x1xf32>
      %c0_40 = arith.constant 0 : index
      %c0_41 = arith.constant 0 : index
      %67 = vector.load %arg11[%c0_40, %c0_41] : memref<32x1xf32, #tpu.memory_space<vmem>>, vector<32x1xf32>
      tpu.vector_store %arg11[%c0_40, %c0_41], %66 {strides = array<i32>} : memref<32x1xf32, #tpu.memory_space<vmem>>, vector<32x1xf32>,
      %cst_42 = arith.constant 0.000000e+00 : f32
      %68 = vector.broadcast %cst_42 : f32 to vector<32x1xf32>
      %c0_43 = arith.constant 0 : index
      %c0_44 = arith.constant 0 : index
      %69 = vector.load %arg12[%c0_43, %c0_44] : memref<32x1xf32, #tpu.memory_space<vmem>>, vector<32x1xf32>
      tpu.vector_store %arg12[%c0_43, %c0_44], %68 {strides = array<i32>} : memref<32x1xf32, #tpu.memory_space<vmem>>, vector<32x1xf32>,
      %cst_45 = arith.constant 0.000000e+00 : f32
      %70 = vector.broadcast %cst_45 : f32 to vector<32x1xf32>
      %c0_46 = arith.constant 0 : index
      %c0_47 = arith.constant 0 : index
      %71 = vector.load %arg13[%c0_46, %c0_47] : memref<32x1xf32, #tpu.memory_space<vmem>>, vector<32x1xf32>
      tpu.vector_store %arg13[%c0_46, %c0_47], %70 {strides = array<i32>} : memref<32x1xf32, #tpu.memory_space<vmem>>, vector<32x1xf32>,
      %cst_48 = arith.constant 0.000000e+00 : f32
      %72 = vector.broadcast %cst_48 : f32 to vector<1x1x128xf32>
      %c0_49 = arith.constant 0 : index
      %c0_50 = arith.constant 0 : index
      %c0_51 = arith.constant 0 : index
      %73 = vector.load %arg9[%c0_49, %c0_50, %c0_51] : memref<1x1x128xf32, #tpu.memory_space<vmem>>, vector<1x1x128xf32>
      tpu.vector_store %arg9[%c0_49, %c0_50, %c0_51], %72 {strides = array<i32>} : memref<1x1x128xf32, #tpu.memory_space<vmem>>, vector<1x1x128xf32>,
    } else {
    }
    %c0_i32_1 = arith.constant 0 : i32
    %3 = arith.cmpi eq, %arg0, %c0_i32_1 : i32
    %c0_i32_2 = arith.constant 0 : i32
    %4 = arith.cmpi eq, %arg1, %c0_i32_2 : i32
    %5 = arith.andi %3, %4 : i1
    %6 = arith.extui %5 : i1 to i32
    %c0_i32_3 = arith.constant 0 : i32
    %7 = arith.cmpi ne, %6, %c0_i32_3 : i32
    scf.if %7 {
      %c0_36 = arith.constant 0 : index
      %c0_37 = arith.constant 0 : index
      %64 = vector.load %arg6[%c0_36, %c0_37] : memref<16x10xf32, #tpu.memory_space<vmem>>, vector<16x10xf32>
      %c0_38 = arith.constant 0 : index
      %c0_39 = arith.constant 0 : index
      %65 = vector.load %arg7[%c0_38, %c0_39] : memref<16x1xi32, #tpu.memory_space<vmem>>, vector<16x1xi32>
      %cst_40 = arith.constant dense<0xFF800000> : vector<16xf32>
      %66 = vector.multi_reduction <maximumf>, %64, %cst_40 [1] : vector<16x10xf32> to vector<16xf32>
      %67 = vector.shape_cast %66 : vector<16xf32> to vector<16x1xf32>
      %68 = vector.broadcast %67 : vector<16x1xf32> to vector<16x10xf32>
      %69 = arith.subf %64, %68 : vector<16x10xf32>
      %70 = math.exp %69 : vector<16x10xf32>
      %cst_41 = arith.constant dense<0.000000e+00> : vector<16xf32>
      %71 = vector.multi_reduction <add>, %70, %cst_41 [1] : vector<16x10xf32> to vector<16xf32>
      %72 = vector.shape_cast %71 : vector<16xf32> to vector<16x1xf32>
      %73 = math.log %72 : vector<16x1xf32>
      %74 = arith.addf %73, %67 : vector<16x1xf32>
      %75 = tpu.iota {dimensions = array<i32: 1>} : vector<16x10xi32>
      %76 = vector.broadcast %65 : vector<16x1xi32> to vector<16x10xi32>
      %77 = arith.cmpi eq, %75, %76 : vector<16x10xi32>
      %cst_42 = arith.constant 0.000000e+00 : f32
      %78 = vector.broadcast %cst_42 : f32 to vector<16x10xf32>
      %79 = arith.select %77, %64, %78 : vector<16x10xi1>, vector<16x10xf32>
      %cst_43 = arith.constant dense<0.000000e+00> : vector<16xf32>
      %80 = vector.multi_reduction <add>, %79, %cst_43 [1] : vector<16x10xf32> to vector<16xf32>
      %81 = vector.shape_cast %80 : vector<16xf32> to vector<16x1xf32>
      %82 = arith.subf %74, %81 : vector<16x1xf32>
      %83 = vector.shape_cast %82 : vector<16x1xf32> to vector<1x16x1xf32>
      %cst_44 = arith.constant dense<0.000000e+00> : vector<1xf32>
      %84 = vector.multi_reduction <add>, %83, %cst_44 [1, 2] : vector<1x16x1xf32> to vector<1xf32>
      %85 = vector.shape_cast %84 : vector<1xf32> to vector<1x1x1xf32>
      %86 = vector.extract %85[0, 0, 0] : f32 from vector<1x1x1xf32>
      %cst_45 = arith.constant 1.600000e+01 : f32
      %87 = arith.divf %86, %cst_45 : f32
      %cst_46 = arith.constant 0.000000e+00 : f32
      %88 = vector.broadcast %cst_46 : f32 to vector<1x1x128xf32>
      %89 = vector.broadcast %87 : f32 to vector<1x1x128xf32>
      %90 = arith.addf %88, %89 : vector<1x1x128xf32>
      %c0_47 = arith.constant 0 : index
      %c0_48 = arith.constant 0 : index
      %c0_49 = arith.constant 0 : index
      %91 = vector.load %arg9[%c0_47, %c0_48, %c0_49] : memref<1x1x128xf32, #tpu.memory_space<vmem>>, vector<1x1x128xf32>
      tpu.vector_store %arg9[%c0_47, %c0_48, %c0_49], %90 {strides = array<i32>} : memref<1x1x128xf32, #tpu.memory_space<vmem>>, vector<1x1x128xf32>,
    } else {
    }
    %c0 = arith.constant 0 : index
    %c0_4 = arith.constant 0 : index
    %8 = vector.load %arg2[%c0, %c0_4] : memref<32x128xbf16, #tpu.memory_space<vmem>>, vector<32x128xbf16>
    %c0_5 = arith.constant 0 : index
    %c0_6 = arith.constant 0 : index
    %9 = vector.load %arg3[%c0_5, %c0_6] : memref<128x128xbf16, #tpu.memory_space<vmem>>, vector<128x128xbf16>
    %cst = arith.constant dense<0.000000e+00> : vector<32x128xf32>
    %10 = tpu.matmul %8, %9, %cst {dimension_numbers = #tpu.dot_dimension_numbers<[1], [1], [0], [0], [0, 0, 1, 0], [], []>} : vector<32x128xbf16>, vector<128x128xbf16>, vector<32x128xf32> -> vector<32x128xf32>
    %11 = tpu.iota {dimensions = array<i32: 0>} : vector<32x128xi32>
    %c32_i32 = arith.constant 32 : i32
    %12 = arith.muli %arg0, %c32_i32 : i32
    %13 = vector.broadcast %12 : i32 to vector<32x128xi32>
    %14 = arith.addi %11, %13 : vector<32x128xi32>
    %15 = tpu.iota {dimensions = array<i32: 1>} : vector<32x128xi32>
    %c128_i32 = arith.constant 128 : i32
    %16 = arith.muli %arg1, %c128_i32 : i32
    %17 = vector.broadcast %16 : i32 to vector<32x128xi32>
    %18 = arith.addi %15, %17 : vector<32x128xi32>
    %19 = arith.cmpi ne, %14, %18 : vector<32x128xi32>
    %c32_i32_7 = arith.constant 32 : i32
    %20 = vector.broadcast %c32_i32_7 : i32 to vector<32x128xi32>
    %21 = arith.cmpi slt, %18, %20 : vector<32x128xi32>
    %22 = arith.andi %19, %21 : vector<32x128xi1>
    %c0_8 = arith.constant 0 : index
    %c0_9 = arith.constant 0 : index
    %23 = vector.load %arg4[%c0_8, %c0_9] : memref<32x1xi32, #tpu.memory_space<vmem>>, vector<32x1xi32>
    %c0_10 = arith.constant 0 : index
    %c0_11 = arith.constant 0 : index
    %24 = vector.load %arg5[%c0_10, %c0_11] : memref<1x128xi32, #tpu.memory_space<vmem>>, vector<1x128xi32>
    %25 = vector.broadcast %23 : vector<32x1xi32> to vector<32x128xi32>
    %26 = vector.broadcast %24 : vector<1x128xi32> to vector<32x128xi32>
    %27 = arith.cmpi eq, %25, %26 : vector<32x128xi32>
    %28 = arith.andi %27, %22 : vector<32x128xi1>
    %cst_12 = arith.constant -1.000000e+30 : f32
    %29 = vector.broadcast %cst_12 : f32 to vector<32x128xf32>
    %30 = arith.select %22, %10, %29 : vector<32x128xi1>, vector<32x128xf32>
    %c0_13 = arith.constant 0 : index
    %c0_14 = arith.constant 0 : index
    %31 = vector.load %arg10[%c0_13, %c0_14] : memref<32x1xf32, #tpu.memory_space<vmem>>, vector<32x1xf32>
    %cst_15 = arith.constant dense<0xFF800000> : vector<32xf32>
    %32 = vector.multi_reduction <maximumf>, %30, %cst_15 [1] : vector<32x128xf32> to vector<32xf32>
    %33 = vector.shape_cast %32 : vector<32xf32> to vector<32x1xf32>
    %34 = arith.maximumf %31, %33 : vector<32x1xf32>
    %35 = vector.broadcast %34 : vector<32x1xf32> to vector<32x128xf32>
    %36 = arith.subf %30, %35 : vector<32x128xf32>
    %37 = math.exp %36 : vector<32x128xf32>
    %c0_16 = arith.constant 0 : index
    %c0_17 = arith.constant 0 : index
    %38 = vector.load %arg11[%c0_16, %c0_17] : memref<32x1xf32, #tpu.memory_space<vmem>>, vector<32x1xf32>
    %39 = arith.subf %31, %34 : vector<32x1xf32>
    %40 = math.exp %39 : vector<32x1xf32>
    %41 = arith.mulf %38, %40 : vector<32x1xf32>
    %cst_18 = arith.constant dense<0.000000e+00> : vector<32xf32>
    %42 = vector.multi_reduction <add>, %37, %cst_18 [1] : vector<32x128xf32> to vector<32xf32>
    %43 = vector.shape_cast %42 : vector<32xf32> to vector<32x1xf32>
    %44 = arith.addf %41, %43 : vector<32x1xf32>
    %c0_19 = arith.constant 0 : index
    %c0_20 = arith.constant 0 : index
    %45 = vector.load %arg11[%c0_19, %c0_20] : memref<32x1xf32, #tpu.memory_space<vmem>>, vector<32x1xf32>
    tpu.vector_store %arg11[%c0_19, %c0_20], %44 {strides = array<i32>} : memref<32x1xf32, #tpu.memory_space<vmem>>, vector<32x1xf32>,
    %c0_21 = arith.constant 0 : index
    %c0_22 = arith.constant 0 : index
    %46 = vector.load %arg10[%c0_21, %c0_22] : memref<32x1xf32, #tpu.memory_space<vmem>>, vector<32x1xf32>
    tpu.vector_store %arg10[%c0_21, %c0_22], %34 {strides = array<i32>} : memref<32x1xf32, #tpu.memory_space<vmem>>, vector<32x1xf32>,
    %c0_23 = arith.constant 0 : index
    %c0_24 = arith.constant 0 : index
    %47 = vector.load %arg12[%c0_23, %c0_24] : memref<32x1xf32, #tpu.memory_space<vmem>>, vector<32x1xf32>
    %cst_25 = arith.constant 0.000000e+00 : f32
    %48 = vector.broadcast %cst_25 : f32 to vector<32x128xf32>
    %49 = arith.select %28, %10, %48 : vector<32x128xi1>, vector<32x128xf32>
    %cst_26 = arith.constant dense<0.000000e+00> : vector<32xf32>
    %50 = vector.multi_reduction <add>, %49, %cst_26 [1] : vector<32x128xf32> to vector<32xf32>
    %51 = vector.shape_cast %50 : vector<32xf32> to vector<32x1xf32>
    %52 = arith.addf %47, %51 : vector<32x1xf32>
    %c0_27 = arith.constant 0 : index
    %c0_28 = arith.constant 0 : index
    %53 = vector.load %arg12[%c0_27, %c0_28] : memref<32x1xf32, #tpu.memory_space<vmem>>, vector<32x1xf32>
    tpu.vector_store %arg12[%c0_27, %c0_28], %52 {strides = array<i32>} : memref<32x1xf32, #tpu.memory_space<vmem>>, vector<32x1xf32>,
    %c0_29 = arith.constant 0 : index
    %c0_30 = arith.constant 0 : index
    %54 = vector.load %arg13[%c0_29, %c0_30] : memref<32x1xf32, #tpu.memory_space<vmem>>, vector<32x1xf32>
    %55 = arith.extui %28 : vector<32x128xi1> to vector<32x128xi32>
    %56 = arith.sitofp %55 : vector<32x128xi32> to vector<32x128xf32>
    %cst_31 = arith.constant dense<0.000000e+00> : vector<32xf32>
    %57 = vector.multi_reduction <add>, %56, %cst_31 [1] : vector<32x128xf32> to vector<32xf32>
    %58 = vector.shape_cast %57 : vector<32xf32> to vector<32x1xf32>
    %59 = arith.addf %54, %58 : vector<32x1xf32>
    %c0_32 = arith.constant 0 : index
    %c0_33 = arith.constant 0 : index
    %60 = vector.load %arg13[%c0_32, %c0_33] : memref<32x1xf32, #tpu.memory_space<vmem>>, vector<32x1xf32>
    tpu.vector_store %arg13[%c0_32, %c0_33], %59 {strides = array<i32>} : memref<32x1xf32, #tpu.memory_space<vmem>>, vector<32x1xf32>,
    %c0_i32_34 = arith.constant 0 : i32
    %61 = arith.cmpi eq, %arg1, %c0_i32_34 : i32
    %62 = arith.extui %61 : i1 to i32
    %c0_i32_35 = arith.constant 0 : i32
    %63 = arith.cmpi ne, %62, %c0_i32_35 : i32
    scf.if %63 {
      %c0_36 = arith.constant 0 : index
      %c0_37 = arith.constant 0 : index
      %64 = vector.load %arg10[%c0_36, %c0_37] : memref<32x1xf32, #tpu.memory_space<vmem>>, vector<32x1xf32>
      %c0_38 = arith.constant 0 : index
      %c0_39 = arith.constant 0 : index
      %65 = vector.load %arg11[%c0_38, %c0_39] : memref<32x1xf32, #tpu.memory_space<vmem>>, vector<32x1xf32>
      %66 = math.log %65 : vector<32x1xf32>
      %67 = arith.addf %64, %66 : vector<32x1xf32>
      %c0_40 = arith.constant 0 : index
      %c0_41 = arith.constant 0 : index
      %68 = vector.load %arg12[%c0_40, %c0_41] : memref<32x1xf32, #tpu.memory_space<vmem>>, vector<32x1xf32>
      %c0_42 = arith.constant 0 : index
      %c0_43 = arith.constant 0 : index
      %69 = vector.load %arg13[%c0_42, %c0_43] : memref<32x1xf32, #tpu.memory_space<vmem>>, vector<32x1xf32>
      %70 = arith.divf %68, %69 : vector<32x1xf32>
      %71 = arith.subf %70, %67 : vector<32x1xf32>
      %cst_44 = arith.constant -1.000000e+00 : f32
      %72 = vector.broadcast %cst_44 : f32 to vector<32x1xf32>
      %73 = arith.mulf %72, %71 : vector<32x1xf32>
      %74 = tpu.iota {dimensions = array<i32: 0>} : vector<32x1xi32>
      %c32_i32_45 = arith.constant 32 : i32
      %75 = arith.muli %arg0, %c32_i32_45 : i32
      %76 = vector.broadcast %75 : i32 to vector<32x1xi32>
      %77 = arith.addi %74, %76 : vector<32x1xi32>
      %c32_i32_46 = arith.constant 32 : i32
      %78 = vector.broadcast %c32_i32_46 : i32 to vector<32x1xi32>
      %79 = arith.cmpi slt, %77, %78 : vector<32x1xi32>
      %cst_47 = arith.constant 0.000000e+00 : f32
      %80 = vector.broadcast %cst_47 : f32 to vector<32x1xf32>
      %81 = arith.select %79, %73, %80 : vector<32x1xi1>, vector<32x1xf32>
      %cst_48 = arith.constant 0.000000e+00 : f32
      %82 = vector.broadcast %cst_48 : f32 to vector<1x1x128xf32>
      %83 = vector.shape_cast %81 : vector<32x1xf32> to vector<1x32x1xf32>
      %cst_49 = arith.constant dense<0.000000e+00> : vector<1xf32>
      %84 = vector.multi_reduction <add>, %83, %cst_49 [1, 2] : vector<1x32x1xf32> to vector<1xf32>
      %85 = vector.shape_cast %84 : vector<1xf32> to vector<1x1x1xf32>
      %86 = vector.extract %85[0, 0, 0] : f32 from vector<1x1x1xf32>
      %87 = vector.broadcast %86 : f32 to vector<1x1x128xf32>
      %88 = arith.addf %82, %87 : vector<1x1x128xf32>
      %c0_50 = arith.constant 0 : index
      %c0_51 = arith.constant 0 : index
      %c0_52 = arith.constant 0 : index
      %89 = vector.load %arg8[%c0_50, %c0_51, %c0_52] : memref<1x1x128xf32, #tpu.memory_space<vmem>>, vector<1x1x128xf32>
      tpu.vector_store %arg8[%c0_50, %c0_51, %c0_52], %88 {strides = array<i32>} : memref<1x1x128xf32, #tpu.memory_space<vmem>>, vector<1x1x128xf32>,
    } else {
    }
    return
  }
  func.func @transform_0(%arg0: i32, %arg1: i32) -> (i32, i32) {
    %c0_i32 = arith.constant 0 : i32
    %c0_i32_0 = arith.constant 0 : i32
    return %arg0, %c0_i32 : i32, i32
  }
  func.func @transform_1(%arg0: i32, %arg1: i32) -> (i32, i32) {
    %c0_i32 = arith.constant 0 : i32
    %c0_i32_0 = arith.constant 0 : i32
    return %arg1, %c0_i32 : i32, i32
  }
  func.func @transform_2(%arg0: i32, %arg1: i32) -> (i32, i32) {
    %c0_i32 = arith.constant 0 : i32
    %c0_i32_0 = arith.constant 0 : i32
    return %arg0, %c0_i32 : i32, i32
  }
  func.func @transform_3(%arg0: i32, %arg1: i32) -> (i32, i32) {
    %c0_i32 = arith.constant 0 : i32
    %c0_i32_0 = arith.constant 0 : i32
    return %c0_i32, %arg1 : i32, i32
  }
  func.func @transform_4(%arg0: i32, %arg1: i32) -> (i32, i32) {
    %c0_i32 = arith.constant 0 : i32
    %c0_i32_0 = arith.constant 0 : i32
    %c0_i32_1 = arith.constant 0 : i32
    return %c0_i32, %c0_i32_0 : i32, i32
  }
  func.func @transform_5(%arg0: i32, %arg1: i32) -> (i32, i32) {
    %c0_i32 = arith.constant 0 : i32
    %c0_i32_0 = arith.constant 0 : i32
    %c0_i32_1 = arith.constant 0 : i32
    return %c0_i32, %c0_i32_0 : i32, i32
  }
  func.func @transform_6(%arg0: i32, %arg1: i32) -> (i32, i32, i32) {
    %c0_i32 = arith.constant 0 : i32
    %c0_i32_0 = arith.constant 0 : i32
    %c0_i32_1 = arith.constant 0 : i32
    return %arg0, %c0_i32, %c0_i32_0 : i32, i32, i32
  }
  func.func @transform_7(%arg0: i32, %arg1: i32) -> (i32, i32, i32) {
    %c0_i32 = arith.constant 0 : i32
    %c0_i32_0 = arith.constant 0 : i32
    %c0_i32_1 = arith.constant 0 : i32
    return %arg0, %c0_i32, %c0_i32_0 : i32, i32, i32
  }
}

</mosaic_0001>

<llo_original>
// kernel: tpu_custom_call.1
$region0: #{tpu_custom_call.1}
  #allocation0 [shape = 'u32[]', space=smem, size = 0x4, offset = 0x4, fixed_abs, tag = 'smem constant byte address 0x4 - core index']
  #allocation1 [shape = 'u32[72,128]{1,0:T(1,128)}', space=vmem, size = 0x9000, scoped, tag = 'internal scratch']
  #allocation2 [shape = 'f32[32,1]{1,0:T(8,128)}', space=vmem, size = 0x4000, scoped, tag = 'scratch operand']
  #allocation3 [shape = 'f32[32,1]{1,0:T(8,128)}', space=vmem, size = 0x4000, scoped, tag = 'scratch operand']
  #allocation4 [shape = 'f32[32,1]{1,0:T(8,128)}', space=vmem, size = 0x4000, scoped, tag = 'scratch operand']
  #allocation5 [shape = 'f32[32,1]{1,0:T(8,128)}', space=vmem, size = 0x4000, scoped, tag = 'scratch operand']
  %s0 = inlined_call_operand.vmem [shape: bf16[128,128], index: 0, kind: input, shape index: {}]
  %s1 = inlined_call_operand.vmem [shape: bf16[128,128], index: 1, kind: input, shape index: {}]
  %s2 = inlined_call_operand.vmem [shape: s32[128,1], index: 2, kind: input, shape index: {}]
  %s3 = inlined_call_operand.vmem [shape: s32[1,128], index: 3, kind: input, shape index: {}]
  %s4 = inlined_call_operand.vmem [shape: f32[16,10], index: 4, kind: input, shape index: {}]
  %s5 = inlined_call_operand.vmem [shape: s32[16,1], index: 5, kind: input, shape index: {}]
  %s6 = inlined_call_operand.hbm [shape: f32[1,1,128], index: 6, kind: output, shape index: {0}]
  %s7 = inlined_call_operand.hbm [shape: f32[1,1,128], index: 7, kind: output, shape index: {1}]
  %8 = xla_tuple %s6, %s7
  %s9 = sld [smem:[#allocation0]]
  $region54: #{tpu_custom_call.1} parent=0
    _
  %s11 = ssub.s32 1, %s9
  %s12 = scalar_select 0, %s11, %s9
  $region1: #{tpu_custom_call.1} parent=0
    #allocation6 [shape = 'u8[512]{0}', space=vmem, size = 0x400, scoped, tag = 'output window, operand 0, single buffered']
    #allocation7 [shape = 's32[1]{0}', space=sflag, size = 0x4, scoped, tag = 'scoped memory for tpu_custom_call.1']
    #allocation8 [shape = 'u8[512]{0}', space=vmem, size = 0x400, scoped, tag = 'output window, operand 1, single buffered']
    #allocation9 [shape = 's32[1]{0}', space=sflag, size = 0x4, scoped, tag = 'scoped memory for tpu_custom_call.1']
    %13 = vsyncpa [#allocation7], 0
    %14 = vsyncpa [#allocation9], 0
    // Predicated region
    $region2: #{tpu_custom_call.1} parent=1 // pred_check
      _
    $region3: #{tpu_custom_call.1} parent=1 // pred_check_branch
      %16 = sbr.rel (0) target = $region5
    $region4: #{tpu_custom_call.1} parent=1 // pred_region
      _
    $region5: #{tpu_custom_call.1} parent=1 // pred_fallthru
      _
    // Predicated region
    $region6: #{tpu_custom_call.1} parent=1 // pred_check
      _
    $region7: #{tpu_custom_call.1} parent=1 // pred_check_branch
      %18 = sbr.rel (0) target = $region9
    $region8: #{tpu_custom_call.1} parent=1 // pred_region
      _
    $region9: #{tpu_custom_call.1} parent=1 // pred_fallthru
      _
    // Predicated region
    $region10: #{tpu_custom_call.1} parent=1 // pred_check
      _
    $region11: #{tpu_custom_call.1} parent=1 // pred_check_branch
      %20 = sbr.rel (0) target = $region13
    $region12: #{tpu_custom_call.1} parent=1 // pred_region
      _
    $region13: #{tpu_custom_call.1} parent=1 // pred_fallthru
      _
    // Predicated region
    $region14: #{tpu_custom_call.1} parent=1 // pred_check
      _
    $region15: #{tpu_custom_call.1} parent=1 // pred_check_branch
      %22 = sbr.rel (0) target = $region17
    $region16: #{tpu_custom_call.1} parent=1 // pred_region
      _
    $region17: #{tpu_custom_call.1} parent=1 // pred_fallthru
      _
    // Predicated region
    $region18: #{tpu_custom_call.1} parent=1 // pred_check
      _
    $region19: #{tpu_custom_call.1} parent=1 // pred_check_branch
      %24 = sbr.rel (0) target = $region21
    $region20: #{tpu_custom_call.1} parent=1 // pred_region
      _
    $region21: #{tpu_custom_call.1} parent=1 // pred_fallthru
      _
    // Predicated region
    $region22: #{tpu_custom_call.1} parent=1 // pred_check
      _
    $region23: #{tpu_custom_call.1} parent=1 // pred_check_branch
      %26 = sbr.rel (0) target = $region25
    $region24: #{tpu_custom_call.1} parent=1 // pred_region
      _
    $region25: #{tpu_custom_call.1} parent=1 // pred_fallthru
      _
    %p27 = scmp.eq.s32.totalorder 0, 0
    // Predicated region
    $region26: #{tpu_custom_call.1} parent=1 // pred_check
      %p28 = pneg %p27
    $region27: #{tpu_custom_call.1} parent=1 // pred_check_branch
      %30 = sbr.rel (%p28) target = $region29
    $region28: #{tpu_custom_call.1} parent=1 // pred_region
      %vm31 = vcmask 7168
      %32 = vst.msk [vmem:[#allocation2] sm:$0xff] %vm31, -inf
      %33 = vst.msk [vmem:[#allocation2 + $0x8] sm:$0xff] %vm31, -inf
      %34 = vst.msk [vmem:[#allocation2 + $0x10] sm:$0xff] %vm31, -inf
      %35 = vst.msk [vmem:[#allocation2 + $0x18] sm:$0xff] %vm31, -inf
      %36 = vst.msk [vmem:[#allocation3] sm:$0xff] %vm31, 0.0
      %37 = vst.msk [vmem:[#allocation3 + $0x8] sm:$0xff] %vm31, 0.0
      %38 = vst.msk [vmem:[#allocation3 + $0x10] sm:$0xff] %vm31, 0.0
      %39 = vst.msk [vmem:[#allocation3 + $0x18] sm:$0xff] %vm31, 0.0
      %40 = vst.msk [vmem:[#allocation4] sm:$0xff] %vm31, 0.0
      %41 = vst.msk [vmem:[#allocation4 + $0x8] sm:$0xff] %vm31, 0.0
      %42 = vst.msk [vmem:[#allocation4 + $0x10] sm:$0xff] %vm31, 0.0
      %43 = vst.msk [vmem:[#allocation4 + $0x18] sm:$0xff] %vm31, 0.0
      %44 = vst.msk [vmem:[#allocation5] sm:$0xff] %vm31, 0.0
      %45 = vst.msk [vmem:[#allocation5 + $0x8] sm:$0xff] %vm31, 0.0
      %46 = vst.msk [vmem:[#allocation5 + $0x10] sm:$0xff] %vm31, 0.0
      %47 = vst.msk [vmem:[#allocation5 + $0x18] sm:$0xff] %vm31, 0.0
      %48 = vst [vmem:[#allocation8] sm:$0x1] 0.0
    $region29: #{tpu_custom_call.1} parent=1 // pred_fallthru
      _
    %p49 = scmp.eq.s32.totalorder 0, 0
    %p50 = pnand %p49, %p27
    %p51 = pneg %p50
    // Predicated region
    $region30: #{tpu_custom_call.1} parent=1 // pred_check
      _
    $region31: #{tpu_custom_call.1} parent=1 // pred_check_branch
      %53 = sbr.rel (%p50) target = $region33
    $region32: #{tpu_custom_call.1} parent=1 // pred_region
      %v54 = vld [vmem:[%s4] sm:$0xff]
      %v55 = vld [vmem:[%s4 + $0x8] sm:$0xff]
      %v56 = vld [vmem:[%s5] sm:$0xff]
      %v57 = vld [vmem:[%s5 + $0x8] sm:$0xff]
      %vm58 = vcmask 80896
      %v59 = vsel %vm58, %v54, -inf
      %60 = vmax.xlane.f32.xlu0 %v59
      %v61 = vpop.xlane.xlu0 %60
      %v62 = vsel %vm58, %v55, -inf
      %63 = vmax.xlane.f32.xlu0 %v62
      %v64 = vpop.xlane.xlu0 %63
      %v65 = vsub.f32 %v54, %v61
      %v66 = vsub.f32 %v55, %v64
      %v67 = vmul.f32 %v65, 1.442695
      %v68 = vpow.pop %v67
      %v69 = vmul.f32 %v66, 1.442695
      %v70 = vpow.pop %v69
      %v71 = vsel %vm58, %v68, 0.0
      %72 = vadd.xlane.f32.xlu0 %v71
      %v73 = vpop.xlane.xlu0 %72
      %v74 = vsel %vm58, %v70, 0.0
      %75 = vadd.xlane.f32.xlu0 %v74
      %v76 = vpop.xlane.xlu0 %75
      %v77 = vlog2.pop %v73
      %v78 = vmul.f32 %v77, 0.6931472
      %v79 = vlog2.pop %v76
      %v80 = vmul.f32 %v79, 0.6931472
      %v81 = vadd.f32 %v78, %v61
      %v82 = vadd.f32 %v80, %v64
      %v83 = vlaneseq
      %v84 = vand.u32 %v83, 127
      %85 = vset.pattern.permute.xlu0 0
      %86 = vperm.xlu0 %85, %v56
      %v87 = vpop.permute.xlu0 %86
      %88 = vset.pattern.permute.xlu0 0
      %89 = vperm.xlu0 %88, %v57
      %v90 = vpop.permute.xlu0 %89
      %vm91 = vcmp.eq.s32.totalorder %v84, %v87
      %vm92 = vcmp.eq.s32.totalorder %v84, %v90
      %v93 = vsel %vm91, %v54, 0.0
      %v94 = vsel %vm92, %v55, 0.0
      %v95 = vsel %vm58, %v93, 0.0
      %96 = vadd.xlane.f32.xlu0 %v95
      %v97 = vpop.xlane.xlu0 %96
      %v98 = vsel %vm58, %v94, 0.0
      %99 = vadd.xlane.f32.xlu0 %v98
      %v100 = vpop.xlane.xlu0 %99
      %v101 = vsub.f32 %v81, %v97
      %v102 = vsub.f32 %v82, %v100
      %vm103 = vcmask 7168
      %v104 = vsel %vm103, %v101, 0.0
      %v105 = vsel %vm103, %v102, 0.0
      %v106 = vadd.f32 %v104, %v105
      %107 = vadd.xlane.f32.xlu0 %v106
      %v108 = vpop.xlane.xlu0 %107
      %v109 = vrot.slane %v108, 4
      %v110 = vadd.f32 %v108, %v109
      %v111 = vrot.slane %v110, 2
      %v112 = vadd.f32 %v110, %v111
      %v113 = vrot.slane %v112, 1
      %v114 = vadd.f32 %v112, %v113
      %s115 = vtos %v114
      %v116 = vrcp.pop 16.0
      %v117 = vmul.f32 16.0, %v116
      %v118 = vsub.f32 1.0, %v117
      %v119 = vmul.f32 %v116, %v118
      %v120 = vadd.f32 %v116, %v119
      %vm121 = vweird.f32 %v116
      %v122 = vsel %vm121, %v116, %v120
      %s123 = vtos %v122
      %s124 = smul.f32 %s115, %s123
      %v125 = vstv %s124
      %v126 = vadd.f32 %v125, 0.0
      %127 = vst [vmem:[#allocation8] sm:$0x1] %v126
    $region33: #{tpu_custom_call.1} parent=1 // pred_fallthru
      _
    %v128 = vld [vmem:[%s0] sm:$0xf]
    %v129 = vld [vmem:[%s0 + $0x4] sm:$0xf]
    %v130 = vld [vmem:[%s0 + $0x8] sm:$0xf]
    %v131 = vld [vmem:[%s0 + $0xc] sm:$0xf]
    %v132 = vld [vmem:[%s1] sm:$0xf]
    %v133 = vld [vmem:[%s1 + $0x4] sm:$0xf]
    %v134 = vld [vmem:[%s1 + $0x8] sm:$0xf]
    %v135 = vld [vmem:[%s1 + $0xc] sm:$0xf]
    %v136 = vld [vmem:[%s1 + $0x10] sm:$0xf]
    %v137 = vld [vmem:[%s1 + $0x14] sm:$0xf]
    %v138 = vld [vmem:[%s1 + $0x18] sm:$0xf]
    %v139 = vld [vmem:[%s1 + $0x1c] sm:$0xf]
    %v140 = vld [vmem:[%s1 + $0x20] sm:$0xf]
    %v141 = vld [vmem:[%s1 + $0x24] sm:$0xf]
    %v142 = vld [vmem:[%s1 + $0x28] sm:$0xf]
    %v143 = vld [vmem:[%s1 + $0x2c] sm:$0xf]
    %v144 = vld [vmem:[%s1 + $0x30] sm:$0xf]
    %v145 = vld [vmem:[%s1 + $0x34] sm:$0xf]
    %v146 = vld [vmem:[%s1 + $0x38] sm:$0xf]
    %v147 = vld [vmem:[%s1 + $0x3c] sm:$0xf]
    %v152 = vunpack.c.l.b16 %v128
    %v153 = vunpack.c.l.b16 %v129
    %v154 = vunpack.c.l.b16 %v130
    %v155 = vunpack.c.l.b16 %v131
    %v156 = vpack.c.b16 %v153, %v152
    %v157 = vpack.c.b16 %v155, %v154
    %v176 = vunpack.c.l.b16 %v132
    %v177 = vunpack.c.l.b16 %v133
    %v178 = vunpack.c.l.b16 %v134
    %v179 = vunpack.c.l.b16 %v135
    %v180 = vunpack.c.l.b16 %v136
    %v181 = vunpack.c.l.b16 %v137
    %v182 = vunpack.c.l.b16 %v138
    %v183 = vunpack.c.l.b16 %v139
    %v184 = vunpack.c.l.b16 %v140
    %v185 = vunpack.c.l.b16 %v141
    %v186 = vunpack.c.l.b16 %v142
    %v187 = vunpack.c.l.b16 %v143
    %v188 = vunpack.c.l.b16 %v144
    %v189 = vunpack.c.l.b16 %v145
    %v190 = vunpack.c.l.b16 %v146
    %v191 = vunpack.c.l.b16 %v147
    %v192 = vpack.c.b16 %v177, %v176
    %v193 = vpack.c.b16 %v179, %v178
    %v194 = vpack.c.b16 %v181, %v180
    %v195 = vpack.c.b16 %v183, %v182
    %v196 = vpack.c.b16 %v185, %v184
    %v197 = vpack.c.b16 %v187, %v186
    %v198 = vpack.c.b16 %v189, %v188
    %v199 = vpack.c.b16 %v191, %v190
    %208 = vmatpush.bf16.xpose.msra.mxu0 %v199
    %209 = vmatpush.bf16.xpose.msra.mxu0 %v198
    %210 = vmatpush.bf16.xpose.msra.mxu0 %v197
    %211 = vmatpush.bf16.xpose.msra.mxu0 %v196
    %212 = vmatpush.bf16.xpose.msra.mxu0 %v195
    %213 = vmatpush.bf16.xpose.msra.mxu0 %v194
    %214 = vmatpush.bf16.xpose.msra.mxu0 %v193
    %215 = vmatpush.bf16.xpose.msra.mxu0 %v192
    %216 = vmatmul.bf16.gmra.mxu0 %v156
    %v217 = vpop.f32.mrf.mxu0
    %v218 = vadd.f32 0.0, %v217
    %v219 = vpop.f32.mrf.mxu0
    %v220 = vadd.f32 0.0, %v219
    %221 = vmatmul.bf16.gmra.mxu0 %v157
    %v222 = vpop.f32.mrf.mxu0
    %v223 = vadd.f32 0.0, %v222
    %v224 = vpop.f32.mrf.mxu0
    %v225 = vadd.f32 0.0, %v224
    %226 = vdwg.mxu0
    %v227 = vlaneseq
    %v228 = vshrl.u32 %v227, 7
    %v229 = vadd.s32 %v228, 8
    %v230 = vadd.s32 %v228, 16
    %v231 = vadd.s32 %v228, 24
    %s232 = smul.u32 0, 32
    %v233 = vstv %s232
    %v234 = vadd.s32 %v228, %v233
    %v235 = vadd.s32 %v229, %v233
    %v236 = vadd.s32 %v230, %v233
    %v237 = vadd.s32 %v231, %v233
    %v238 = vlaneseq
    %v239 = vand.u32 %v238, 127
    %s240 = smul.u32 0, 128
    %v241 = vstv %s240
    %v242 = vadd.s32 %v239, %v241
    %vm243 = vcmp.ne.s32.totalorder %v234, %v242
    %vm244 = vcmp.ne.s32.totalorder %v235, %v242
    %vm245 = vcmp.ne.s32.totalorder %v236, %v242
    %vm246 = vcmp.ne.s32.totalorder %v237, %v242
    %vm247 = vcmp.lt.s32.totalorder %v242, 32
    %vm248 = vmand %vm243, %vm247
    %vm249 = vmand %vm244, %vm247
    %vm250 = vmand %vm245, %vm247
    %vm251 = vmand %vm246, %vm247
    %v252 = vld [vmem:[%s2] sm:$0xff]
    %v253 = vld [vmem:[%s2 + $0x8] sm:$0xff]
    %v254 = vld [vmem:[%s2 + $0x10] sm:$0xff]
    %v255 = vld [vmem:[%s2 + $0x18] sm:$0xff]
    %v256 = vld [vmem:[%s3] sm:$0x1]
    %257 = vset.pattern.permute.xlu0 0
    %258 = vperm.xlu0 %257, %v252
    %v259 = vpop.permute.xlu0 %258
    %260 = vset.pattern.permute.xlu0 0
    %261 = vperm.xlu0 %260, %v253
    %v262 = vpop.permute.xlu0 %261
    %263 = vset.pattern.permute.xlu0 0
    %264 = vperm.xlu0 %263, %v254
    %v265 = vpop.permute.xlu0 %264
    %266 = vset.pattern.permute.xlu0 0
    %267 = vperm.xlu0 %266, %v255
    %v268 = vpop.permute.xlu0 %267
    %v269 = vperm.slane %v256, 0
    %vm270 = vcmp.eq.s32.totalorder %v259, %v269
    %vm271 = vcmp.eq.s32.totalorder %v262, %v269
    %vm272 = vcmp.eq.s32.totalorder %v265, %v269
    %vm273 = vcmp.eq.s32.totalorder %v268, %v269
    %vm274 = vmand %vm270, %vm248
    %vm275 = vmand %vm271, %vm249
    %vm276 = vmand %vm272, %vm250
    %vm277 = vmand %vm273, %vm251
    %v278 = vsel %vm248, %v218, -1e+30
    %v279 = vsel %vm249, %v220, -1e+30
    %v280 = vsel %vm250, %v223, -1e+30
    %v281 = vsel %vm251, %v225, -1e+30
    %v282 = vld [vmem:[#allocation2] sm:$0xff]
    %v283 = vld [vmem:[#allocation2 + $0x8] sm:$0xff]
    %v284 = vld [vmem:[#allocation2 + $0x10] sm:$0xff]
    %v285 = vld [vmem:[#allocation2 + $0x18] sm:$0xff]
    %286 = vmax.xlane.f32.xlu0 %v278
    %v287 = vpop.xlane.xlu0 %286
    %288 = vmax.xlane.f32.xlu0 %v279
    %v289 = vpop.xlane.xlu0 %288
    %290 = vmax.xlane.f32.xlu0 %v280
    %v291 = vpop.xlane.xlu0 %290
    %292 = vmax.xlane.f32.xlu0 %v281
    %v293 = vpop.xlane.xlu0 %292
    %v294 = vmax.f32 %v282, %v287
    %v295 = vmax.f32 %v283, %v289
    %v296 = vmax.f32 %v284, %v291
    %v297 = vmax.f32 %v285, %v293
    %299 = vset.pattern.permute.xlu0 0
    %300 = vperm.xlu0 %299, %v294
    %v301 = vpop.permute.xlu0 %300
    %304 = vset.pattern.permute.xlu0 0
    %305 = vperm.xlu0 %304, %v295
    %v306 = vpop.permute.xlu0 %305
    %309 = vset.pattern.permute.xlu0 0
    %310 = vperm.xlu0 %309, %v296
    %v311 = vpop.permute.xlu0 %310
    %314 = vset.pattern.permute.xlu0 0
    %315 = vperm.xlu0 %314, %v297
    %v316 = vpop.permute.xlu0 %315
    %v318 = vsub.f32 %v278, %v301
    %v319 = vsub.f32 %v279, %v306
    %v320 = vsub.f32 %v280, %v311
    %v321 = vsub.f32 %v281, %v316
    %v322 = vmul.f32 %v318, 1.442695
    %v323 = vpow.pop %v322
    %v324 = vmul.f32 %v319, 1.442695
    %v325 = vpow.pop %v324
    %v326 = vmul.f32 %v320, 1.442695
    %v327 = vpow.pop %v326
    %v328 = vmul.f32 %v321, 1.442695
    %v329 = vpow.pop %v328
    %v330 = vld [vmem:[#allocation3] sm:$0xff]
    %v331 = vld [vmem:[#allocation3 + $0x8] sm:$0xff]
    %v332 = vld [vmem:[#allocation3 + $0x10] sm:$0xff]
    %v333 = vld [vmem:[#allocation3 + $0x18] sm:$0xff]
    %v334 = vsub.f32 %v282, %v294
    %v335 = vsub.f32 %v283, %v295
    %v336 = vsub.f32 %v284, %v296
    %v337 = vsub.f32 %v285, %v297
    %v338 = vmul.f32 %v334, 1.442695
    %v339 = vpow.pop %v338
    %v340 = vmul.f32 %v335, 1.442695
    %v341 = vpow.pop %v340
    %v342 = vmul.f32 %v336, 1.442695
    %v343 = vpow.pop %v342
    %v344 = vmul.f32 %v337, 1.442695
    %v345 = vpow.pop %v344
    %v346 = vmul.f32 %v330, %v339
    %v347 = vmul.f32 %v331, %v341
    %v348 = vmul.f32 %v332, %v343
    %v349 = vmul.f32 %v333, %v345
    %350 = vadd.xlane.f32.xlu0 %v323
    %v351 = vpop.xlane.xlu0 %350
    %352 = vadd.xlane.f32.xlu0 %v325
    %v353 = vpop.xlane.xlu0 %352
    %354 = vadd.xlane.f32.xlu0 %v327
    %v355 = vpop.xlane.xlu0 %354
    %356 = vadd.xlane.f32.xlu0 %v329
    %v357 = vpop.xlane.xlu0 %356
    %v358 = vadd.f32 %v346, %v351
    %v359 = vadd.f32 %v347, %v353
    %v360 = vadd.f32 %v348, %v355
    %v361 = vadd.f32 %v349, %v357
    %vm362 = vcmask 7168
    %363 = vst.msk [vmem:[#allocation3] sm:$0xff] %vm362, %v358
    %364 = vst.msk [vmem:[#allocation3 + $0x8] sm:$0xff] %vm362, %v359
    %365 = vst.msk [vmem:[#allocation3 + $0x10] sm:$0xff] %vm362, %v360
    %366 = vst.msk [vmem:[#allocation3 + $0x18] sm:$0xff] %vm362, %v361
    %367 = vst.msk [vmem:[#allocation2] sm:$0xff] %vm362, %v294
    %368 = vst.msk [vmem:[#allocation2 + $0x8] sm:$0xff] %vm362, %v295
    %369 = vst.msk [vmem:[#allocation2 + $0x10] sm:$0xff] %vm362, %v296
    %370 = vst.msk [vmem:[#allocation2 + $0x18] sm:$0xff] %vm362, %v297
    %v371 = vld [vmem:[#allocation4] sm:$0xff]
    %v372 = vld [vmem:[#allocation4 + $0x8] sm:$0xff]
    %v373 = vld [vmem:[#allocation4 + $0x10] sm:$0xff]
    %v374 = vld [vmem:[#allocation4 + $0x18] sm:$0xff]
    %v375 = vsel %vm274, %v218, 0.0
    %v376 = vsel %vm275, %v220, 0.0
    %v377 = vsel %vm276, %v223, 0.0
    %v378 = vsel %vm277, %v225, 0.0
    %379 = vadd.xlane.f32.xlu0 %v375
    %v380 = vpop.xlane.xlu0 %379
    %381 = vadd.xlane.f32.xlu0 %v376
    %v382 = vpop.xlane.xlu0 %381
    %383 = vadd.xlane.f32.xlu0 %v377
    %v384 = vpop.xlane.xlu0 %383
    %385 = vadd.xlane.f32.xlu0 %v378
    %v386 = vpop.xlane.xlu0 %385
    %v387 = vadd.f32 %v371, %v380
    %v388 = vadd.f32 %v372, %v382
    %v389 = vadd.f32 %v373, %v384
    %v390 = vadd.f32 %v374, %v386
    %391 = vst.msk [vmem:[#allocation4] sm:$0xff] %vm362, %v387
    %392 = vst.msk [vmem:[#allocation4 + $0x8] sm:$0xff] %vm362, %v388
    %393 = vst.msk [vmem:[#allocation4 + $0x10] sm:$0xff] %vm362, %v389
    %394 = vst.msk [vmem:[#allocation4 + $0x18] sm:$0xff] %vm362, %v390
    %v395 = vld [vmem:[#allocation5] sm:$0xff]
    %v396 = vld [vmem:[#allocation5 + $0x8] sm:$0xff]
    %v397 = vld [vmem:[#allocation5 + $0x10] sm:$0xff]
    %v398 = vld [vmem:[#allocation5 + $0x18] sm:$0xff]
    %v399 = vsel %vm274, 1, 0
    %v400 = vsel %vm275, 1, 0
    %v401 = vsel %vm276, 1, 0
    %v402 = vsel %vm277, 1, 0
    %v403 = vcvt.s32.f32 %v399
    %v404 = vcvt.s32.f32 %v400
    %v405 = vcvt.s32.f32 %v401
    %v406 = vcvt.s32.f32 %v402
    %407 = vadd.xlane.f32.xlu0 %v403
    %v408 = vpop.xlane.xlu0 %407
    %409 = vadd.xlane.f32.xlu0 %v404
    %v410 = vpop.xlane.xlu0 %409
    %411 = vadd.xlane.f32.xlu0 %v405
    %v412 = vpop.xlane.xlu0 %411
    %413 = vadd.xlane.f32.xlu0 %v406
    %v414 = vpop.xlane.xlu0 %413
    %v415 = vadd.f32 %v395, %v408
    %v416 = vadd.f32 %v396, %v410
    %v417 = vadd.f32 %v397, %v412
    %v418 = vadd.f32 %v398, %v414
    %419 = vst.msk [vmem:[#allocation5] sm:$0xff] %vm362, %v415
    %420 = vst.msk [vmem:[#allocation5 + $0x8] sm:$0xff] %vm362, %v416
    %421 = vst.msk [vmem:[#allocation5 + $0x10] sm:$0xff] %vm362, %v417
    %422 = vst.msk [vmem:[#allocation5 + $0x18] sm:$0xff] %vm362, %v418
    // Predicated region
    $region34: #{tpu_custom_call.1} parent=1 // pred_check
      %p423 = pneg %p27
    $region35: #{tpu_custom_call.1} parent=1 // pred_check_branch
      %425 = sbr.rel (%p423) target = $region37
    $region36: #{tpu_custom_call.1} parent=1 // pred_region
      %v426 = vld [vmem:[#allocation2] sm:$0xff]
      %v427 = vld [vmem:[#allocation2 + $0x8] sm:$0xff]
      %v428 = vld [vmem:[#allocation2 + $0x10] sm:$0xff]
      %v429 = vld [vmem:[#allocation2 + $0x18] sm:$0xff]
      %v430 = vld [vmem:[#allocation3] sm:$0xff]
      %v431 = vld [vmem:[#allocation3 + $0x8] sm:$0xff]
      %v432 = vld [vmem:[#allocation3 + $0x10] sm:$0xff]
      %v433 = vld [vmem:[#allocation3 + $0x18] sm:$0xff]
      %v434 = vlog2.pop %v430
      %v435 = vmul.f32 %v434, 0.6931472
      %v436 = vlog2.pop %v431
      %v437 = vmul.f32 %v436, 0.6931472
      %v438 = vlog2.pop %v432
      %v439 = vmul.f32 %v438, 0.6931472
      %v440 = vlog2.pop %v433
      %v441 = vmul.f32 %v440, 0.6931472
      %v442 = vadd.f32 %v426, %v435
      %v443 = vadd.f32 %v427, %v437
      %v444 = vadd.f32 %v428, %v439
      %v445 = vadd.f32 %v429, %v441
      %v446 = vld [vmem:[#allocation4] sm:$0xff]
      %v447 = vld [vmem:[#allocation4 + $0x8] sm:$0xff]
      %v448 = vld [vmem:[#allocation4 + $0x10] sm:$0xff]
      %v449 = vld [vmem:[#allocation4 + $0x18] sm:$0xff]
      %v450 = vld [vmem:[#allocation5] sm:$0xff]
      %v451 = vld [vmem:[#allocation5 + $0x8] sm:$0xff]
      %v452 = vld [vmem:[#allocation5 + $0x10] sm:$0xff]
      %v453 = vld [vmem:[#allocation5 + $0x18] sm:$0xff]
      %v454 = vrcp.pop %v450
      %v455 = vmul.f32 %v450, %v454
      %v456 = vsub.f32 1.0, %v455
      %v457 = vmul.f32 %v454, %v456
      %v458 = vadd.f32 %v454, %v457
      %vm459 = vweird.f32 %v450
      %vm460 = vweird.f32 %v454
      %vm461 = vmor %vm459, %vm460
      %v462 = vsel %vm461, %v454, %v458
      %v463 = vand.u32 2147483647, %v450
      %vm464 = vcmp.eq.f32.partialorder %v463, 8.507059e+37
      %v465 = vand.u32 %v450, 2147483648
      %v466 = vor.u32 1.1754944e-38, %v465
      %v467 = vsel %vm464, %v466, %v462
      %v468 = vmul.f32 %v446, %v467
      %v469 = vrcp.pop %v451
      %v470 = vmul.f32 %v451, %v469
      %v471 = vsub.f32 1.0, %v470
      %v472 = vmul.f32 %v469, %v471
      %v473 = vadd.f32 %v469, %v472
      %vm474 = vweird.f32 %v451
      %vm475 = vweird.f32 %v469
      %vm476 = vmor %vm474, %vm475
      %v477 = vsel %vm476, %v469, %v473
      %v478 = vand.u32 2147483647, %v451
      %vm479 = vcmp.eq.f32.partialorder %v478, 8.507059e+37
      %v480 = vand.u32 %v451, 2147483648
      %v481 = vor.u32 1.1754944e-38, %v480
      %v482 = vsel %vm479, %v481, %v477
      %v483 = vmul.f32 %v447, %v482
      %v484 = vrcp.pop %v452
      %v485 = vmul.f32 %v452, %v484
      %v486 = vsub.f32 1.0, %v485
      %v487 = vmul.f32 %v484, %v486
      %v488 = vadd.f32 %v484, %v487
      %vm489 = vweird.f32 %v452
      %vm490 = vweird.f32 %v484
      %vm491 = vmor %vm489, %vm490
      %v492 = vsel %vm491, %v484, %v488
      %v493 = vand.u32 2147483647, %v452
      %vm494 = vcmp.eq.f32.partialorder %v493, 8.507059e+37
      %v495 = vand.u32 %v452, 2147483648
      %v496 = vor.u32 1.1754944e-38, %v495
      %v497 = vsel %vm494, %v496, %v492
      %v498 = vmul.f32 %v448, %v497
      %v499 = vrcp.pop %v453
      %v500 = vmul.f32 %v453, %v499
      %v501 = vsub.f32 1.0, %v500
      %v502 = vmul.f32 %v499, %v501
      %v503 = vadd.f32 %v499, %v502
      %vm504 = vweird.f32 %v453
      %vm505 = vweird.f32 %v499
      %vm506 = vmor %vm504, %vm505
      %v507 = vsel %vm506, %v499, %v503
      %v508 = vand.u32 2147483647, %v453
      %vm509 = vcmp.eq.f32.partialorder %v508, 8.507059e+37
      %v510 = vand.u32 %v453, 2147483648
      %v511 = vor.u32 1.1754944e-38, %v510
      %v512 = vsel %vm509, %v511, %v507
      %v513 = vmul.f32 %v449, %v512
      %v514 = vsub.f32 %v468, %v442
      %v515 = vsub.f32 %v483, %v443
      %v516 = vsub.f32 %v498, %v444
      %v517 = vsub.f32 %v513, %v445
      %v518 = vmul.f32 %v514, -1.0
      %v519 = vmul.f32 %v515, -1.0
      %v520 = vmul.f32 %v516, -1.0
      %v521 = vmul.f32 %v517, -1.0
      %vm522 = vcmp.lt.s32.totalorder %v234, 32
      %vm523 = vcmp.lt.s32.totalorder %v235, 32
      %vm524 = vcmp.lt.s32.totalorder %v236, 32
      %vm525 = vcmp.lt.s32.totalorder %v237, 32
      %v526 = vsel %vm522, %v518, 0.0
      %v527 = vsel %vm523, %v519, 0.0
      %v528 = vsel %vm524, %v520, 0.0
      %v529 = vsel %vm525, %v521, 0.0
      %v530 = vsel %vm362, %v526, 0.0
      %v531 = vsel %vm362, %v527, 0.0
      %v532 = vadd.f32 %v530, %v531
      %v533 = vsel %vm362, %v528, 0.0
      %v534 = vadd.f32 %v532, %v533
      %v535 = vsel %vm362, %v529, 0.0
      %v536 = vadd.f32 %v534, %v535
      %537 = vadd.xlane.f32.xlu0 %v536
      %v538 = vpop.xlane.xlu0 %537
      %v539 = vrot.slane %v538, 4
      %v540 = vadd.f32 %v538, %v539
      %v541 = vrot.slane %v540, 2
      %v542 = vadd.f32 %v540, %v541
      %v543 = vrot.slane %v542, 1
      %v544 = vadd.f32 %v542, %v543
      %s545 = vtos %v544
      %v546 = vstv %s545
      %v547 = vadd.f32 %v546, 0.0
      %548 = vst [vmem:[#allocation6] sm:$0x1] %v547
    $region37: #{tpu_custom_call.1} parent=1 // pred_fallthru
      _
    // Predicated region
    $region38: #{tpu_custom_call.1} parent=1 // pred_check
      _
    $region39: #{tpu_custom_call.1} parent=1 // pred_check_branch
      %550 = sbr.rel (0) target = $region41
    $region40: #{tpu_custom_call.1} parent=1 // pred_region
      %552 = vsyncadd [#allocation7], 0
      %s554 = sshll.u32 [#allocation6], 4
      %s555 = int_to_ptr.vmem [resolvable:$true] %s554
      %s556 = sshll.u32 %s6, 4
      %s557 = int_to_ptr.hbm [resolvable:$true] %s556
      %559 = dma.vmem_to_hbm [thread:$0]  %s555, 16, %s557, [#allocation7]
    $region41: #{tpu_custom_call.1} parent=1 // pred_fallthru
      _
    // Predicated region
    $region42: #{tpu_custom_call.1} parent=1 // pred_check
      _
    $region43: #{tpu_custom_call.1} parent=1 // pred_check_branch
      %561 = sbr.rel (0) target = $region45
    $region44: #{tpu_custom_call.1} parent=1 // pred_region
      %563 = vsyncadd [#allocation9], 0
      %s565 = sshll.u32 [#allocation8], 4
      %s566 = int_to_ptr.vmem [resolvable:$true] %s565
      %s567 = sshll.u32 %s7, 4
      %s568 = int_to_ptr.hbm [resolvable:$true] %s567
      %570 = dma.vmem_to_hbm [thread:$0]  %s566, 16, %s568, [#allocation9]
    $region45: #{tpu_custom_call.1} parent=1 // pred_fallthru
      _
    // Predicated region
    $region46: #{tpu_custom_call.1} parent=1 // pred_check
      _
    $region47: #{tpu_custom_call.1} parent=1 // pred_check_branch
      %572 = sbr.rel (0) target = $region49
    $region48: #{tpu_custom_call.1} parent=1 // pred_region
      %574 = dma.done [#allocation7], 16
    $region49: #{tpu_custom_call.1} parent=1 // pred_fallthru
      _
    // Predicated region
    $region50: #{tpu_custom_call.1} parent=1 // pred_check
      _
    $region51: #{tpu_custom_call.1} parent=1 // pred_check_branch
      %576 = sbr.rel (0) target = $region53
    $region52: #{tpu_custom_call.1} parent=1 // pred_region
      %578 = dma.done [#allocation9], 16
    $region53: #{tpu_custom_call.1} parent=1 // pred_fallthru
      _
    %579 = vsyncpa [#allocation7], 1
    %580 = vsyncpa [#allocation9], 1

</llo_original>
